<compile_context>
chip_gen: v5e
topology: v5e:2x2
jax: 0.10.0
libtpu: 0.0.40
codegen_flags: <defaults>
</compile_context>

<pallas_src>
import functools
import math

import jax
import jax.numpy as jnp
from jax.experimental import pallas as pl
from jax.experimental.pallas import tpu as pltpu


# ---------------------------------------------------------------------------
# Chip-aware helpers
# ---------------------------------------------------------------------------

def _vmem_capacity_bytes():
    try:
        return int(pltpu.get_tpu_info().vmem_capacity_bytes)
    except Exception:
        return 64 * 1024 * 1024            # conservative (v7x per-TensorCore)


def _default_tile():
    """256-wide tiles on v6e/v7x (2x256 MXU); 128 on v5e/older (4x128 MXU)."""
    try:
        kind = jax.devices()[0].device_kind.lower()
    except Exception:
        return 128
    if any(t in kind for t in ("v6", "v7", "tpu7")):
        return 256
    return 128


def _maybe_vmem_limit(est_bytes):
    """Raise the scoped-VMEM limit only when the working set needs it.

    Threshold keyed to the smallest default scoped limit (v5e: 16 MiB); cap at
    ~85% of the chip's physical VMEM (v7x: 64 MiB, v5e/v6e: 128 MiB).
    """
    smallest_default_scoped = 16 * 1024 * 1024
    if est_bytes <= int(0.8 * smallest_default_scoped):
        return None
    cap = int(0.85 * _vmem_capacity_bytes())
    return max(smallest_default_scoped, min(int(est_bytes * 3 // 2), cap))


def _pick_tile(n, target, mult):
    """Largest tile <= target that divides n and is a multiple of `mult`."""
    if n <= target:
        return n
    t = (min(target, n) // mult) * mult
    while t >= mult:
        if n % t == 0:
            return t
        t -= mult
    return n


# ---------------------------------------------------------------------------
# Kernel 1: fused QKV projection (computed exactly once per token)
# ---------------------------------------------------------------------------

def _qkv_proj_kernel(x_ref, wqkv_ref, qkv_ref, *, compute_dtype):
    x = x_ref[...].astype(compute_dtype)                              # [tr, D]
    y = jnp.dot(x, wqkv_ref[...], preferred_element_type=jnp.float32)  # [tr, 3D]
    qkv_ref[...] = y.astype(qkv_ref.dtype)


# ---------------------------------------------------------------------------
# Kernel 2: flash attention + Wo + residual + LayerNorm1
# ---------------------------------------------------------------------------

def _attn_ln1_kernel(x_ref, q_ref, k_ref, v_ref, wo_ref, ln1w_ref, ln1b_ref,
                     a1_ref, m_scr, l_scr, acc_scr,
                     *, heads, eps, compute_dtype):
    ki = pl.program_id(2)

    @pl.when(ki == 0)
    def _init():
        m_scr[...] = jnp.full(m_scr.shape, -jnp.inf, m_scr.dtype)
        l_scr[...] = jnp.zeros(l_scr.shape, l_scr.dtype)
        acc_scr[...] = jnp.zeros(acc_scr.shape, acc_scr.dtype)

    q = q_ref[0]                                   # [H, tq, dk] (pre-scaled)
    k = k_ref[0]                                   # [H, tk, dk]
    v = v_ref[0]                                   # [H, tk, dk]

    # ---- online softmax over K/V tiles (flash-attention style) ----
    s = jnp.einsum("hqe,hke->hqk", q, k,
                   preferred_element_type=jnp.float32)        # [H, tq, tk]
    m_prev = m_scr[...]
    m_new = jnp.maximum(m_prev, s.max(axis=-1, keepdims=True))
    alpha = jnp.exp(m_prev - m_new)
    p = jnp.exp(s - m_new)
    l_scr[...] = alpha * l_scr[...] + p.sum(axis=-1, keepdims=True)
    acc_scr[...] = alpha * acc_scr[...] + jnp.einsum(
        "hqk,hke->hqe", p.astype(compute_dtype), v,
        preferred_element_type=jnp.float32)
    m_scr[...] = m_new

    # ---- epilogue: Wo, residual + LayerNorm1 ----
    @pl.when(ki == pl.num_programs(2) - 1)
    def _epilogue():
        inv_l = pl.reciprocal(l_scr[...], approx=True)         # EUP slot
        attn = (acc_scr[...] * inv_l).astype(compute_dtype)    # [H, tq, dk]
        # concat(heads) @ Wo == sum_h attn[h] @ Wo[h]; accumulate directly into
        # a single [tq, D] f32 value (no [H, tq, D] intermediate, no head-sum).
        a1_pre = jnp.dot(attn[0], wo_ref[0],
                         preferred_element_type=jnp.float32)
        for h in range(1, heads):
            a1_pre = a1_pre + jnp.dot(attn[h], wo_ref[h],
                                      preferred_element_type=jnp.float32)

        r1 = x_ref[0].astype(jnp.float32) + a1_pre
        mu = jnp.mean(r1, axis=-1, keepdims=True)
        var = jnp.mean((r1 - mu) ** 2, axis=-1, keepdims=True)
        a1 = (r1 - mu) * jax.lax.rsqrt(var + eps) * ln1w_ref[...] + ln1b_ref[...]
        a1_ref[0] = a1.astype(a1_ref.dtype)


# ---------------------------------------------------------------------------
# Kernel 3: FFN (d_ff-tiled, streamed W1/W2) + residual + LayerNorm2
# ---------------------------------------------------------------------------

def _ffn_ln2_kernel(a1_ref, w1_ref, w2_ref, ln2w_ref, ln2b_ref, out_ref,
                    acc_scr, *, eps, compute_dtype):
    fi = pl.program_id(1)

    @pl.when(fi == 0)
    def _init():
        acc_scr[...] = jnp.zeros(acc_scr.shape, acc_scr.dtype)

    a1 = a1_ref[...].astype(compute_dtype)                             # [tr, D]
    h = jnp.maximum(jnp.dot(a1, w1_ref[...],
                            preferred_element_type=jnp.float32), 0.0)  # [tr, tf]
    acc_scr[...] += jnp.dot(h.astype(compute_dtype), w2_ref[...],
                            preferred_element_type=jnp.float32)        # [tr, D]

    @pl.when(fi == pl.num_programs(1) - 1)
    def _epilogue():
        r2 = a1_ref[...].astype(jnp.float32) + acc_scr[...]
        mu = jnp.mean(r2, axis=-1, keepdims=True)
        var = jnp.mean((r2 - mu) ** 2, axis=-1, keepdims=True)
        out_ref[...] = ((r2 - mu) * jax.lax.rsqrt(var + eps) * ln2w_ref[...]
                        + ln2b_ref[...]).astype(out_ref.dtype)


# ---------------------------------------------------------------------------
# Wrapper
# ---------------------------------------------------------------------------

def decoder_block(x, params, *, heads, eps=1e-5, compute_dtype=jnp.bfloat16,
                  block_q=None, block_k=None, block_rows=512, block_ff=512):
    """x: [B, S, D] float32. params: dict of [in,out] weights + LN params."""
    B, S, D = x.shape
    assert D % heads == 0
    d_key = D // heads
    d_ff = params["w1"].shape[1]
    cd = jnp.dtype(compute_dtype)
    cdb = cd.itemsize

    tile_default = _default_tile()
    tq = _pick_tile(S, block_q or tile_default, 8)
    tk = _pick_tile(S, block_k or tile_default, 8)
    n_q, n_k = S // tq, S // tk

    rows = B * S
    tr = _pick_tile(rows, block_rows, 8)
    n_r = rows // tr
    tf = _pick_tile(d_ff, block_ff, 128)
    n_f = d_ff // tf

    # ---- host-side weight prep (once, outside the hot loop) ----
    # Fold 1/sqrt(d_key) into Wq so neither scores nor q need scaling later.
    wqkv = jnp.concatenate(
        [params["wq"] * (1.0 / math.sqrt(d_key)), params["wk"], params["wv"]],
        axis=1).astype(cd)                                       # [D, 3D]
    wo3 = params["wo"].reshape(heads, d_key, D).astype(cd)       # [H, dk, D]
    w1 = params["w1"].astype(cd)                                 # [D, d_ff]
    w2 = params["w2"].astype(cd)                                 # [d_ff, D]
    ln1_w = params["ln1_w"].reshape(1, D).astype(jnp.float32)
    ln1_b = params["ln1_b"].reshape(1, D).astype(jnp.float32)
    ln2_w = params["ln2_w"].reshape(1, D).astype(jnp.float32)
    ln2_b = params["ln2_b"].reshape(1, D).astype(jnp.float32)

    # ------------------------------------------------------------------
    # Kernel 1: fused QKV projection (K/V computed exactly once).
    # ------------------------------------------------------------------
    x2d = x.reshape(rows, D)
    est1 = 2 * (tr * D * 4 + tr * 3 * D * cdb + D * 3 * D * cdb)
    cost1 = pl.CostEstimate(
        flops=int(2 * rows * D * 3 * D), transcendentals=0,
        bytes_accessed=int(rows * D * 4 + 3 * D * D * cdb + rows * 3 * D * cdb))
    qkv = pl.pallas_call(
        functools.partial(_qkv_proj_kernel, compute_dtype=cd),
        out_shape=jax.ShapeDtypeStruct((rows, 3 * D), cd),
        grid_spec=pltpu.PrefetchScalarGridSpec(
            num_scalar_prefetch=0,
            grid=(n_r,),
            in_specs=[pl.BlockSpec((tr, D), lambda r: (r, 0)),
                      pl.BlockSpec((D, 3 * D), lambda r: (0, 0))],
            out_specs=pl.BlockSpec((tr, 3 * D), lambda r: (r, 0)),
        ),
        compiler_params=pltpu.CompilerParams(
            dimension_semantics=("parallel",),
            vmem_limit_bytes=_maybe_vmem_limit(est1)),
        cost_estimate=cost1,
    )(x2d, wqkv)

    # XLA layout plumbing (bandwidth only): head-major q/k/v [B, H, S, dk].
    qkv = qkv.reshape(B, S, 3, heads, d_key)
    q = jnp.transpose(qkv[:, :, 0], (0, 2, 1, 3))
    k = jnp.transpose(qkv[:, :, 1], (0, 2, 1, 3))
    v = jnp.transpose(qkv[:, :, 2], (0, 2, 1, 3))

    # ------------------------------------------------------------------
    # Kernel 2: flash attention + Wo + residual + LayerNorm1.
    # ------------------------------------------------------------------
    est2 = (2 * (tq * D * 4)                              # x tile (residual)
            + 2 * (heads * tq * d_key * cdb)              # q
            + 4 * (heads * tk * d_key * cdb)              # k, v (double-buf)
            + 2 * (heads * d_key * D * cdb + 4 * D * 4)   # Wo + LN params
            + 2 * (tq * D * 4)                            # a1 out
            + heads * tq * (d_key + 2 * 128) * 4)         # scratch (padded m/l)
    cost2 = pl.CostEstimate(
        flops=int(4 * B * S * S * D + 2 * B * S * D * D),
        transcendentals=int(2 * B * heads * S * S),
        bytes_accessed=int(B * S * D * 4 + B * S * D * cdb
                           + 2 * n_q * B * S * D * cdb
                           + heads * d_key * D * cdb + B * S * D * 4))
    a1 = pl.pallas_call(
        functools.partial(_attn_ln1_kernel, heads=heads, eps=eps,
                          compute_dtype=cd),
        out_shape=jax.ShapeDtypeStruct((B, S, D), jnp.float32),
        grid_spec=pltpu.PrefetchScalarGridSpec(
            num_scalar_prefetch=0,
            grid=(B, n_q, n_k),
            in_specs=[
                pl.BlockSpec((1, tq, D), lambda b, qi, ki: (b, qi, 0)),
                pl.BlockSpec((1, heads, tq, d_key),
                             lambda b, qi, ki: (b, 0, qi, 0)),
                pl.BlockSpec((1, heads, tk, d_key),
                             lambda b, qi, ki: (b, 0, ki, 0)),
                pl.BlockSpec((1, heads, tk, d_key),
                             lambda b, qi, ki: (b, 0, ki, 0)),
                pl.BlockSpec((heads, d_key, D), lambda b, qi, ki: (0, 0, 0)),
                pl.BlockSpec((1, D), lambda b, qi, ki: (0, 0)),
                pl.BlockSpec((1, D), lambda b, qi, ki: (0, 0)),
            ],
            out_specs=pl.BlockSpec((1, tq, D), lambda b, qi, ki: (b, qi, 0)),
            scratch_shapes=[
                pltpu.VMEM((heads, tq, 1), jnp.float32),       # running max
                pltpu.VMEM((heads, tq, 1), jnp.float32),       # running denom
                pltpu.VMEM((heads, tq, d_key), jnp.float32),   # accumulator
            ],
        ),
        compiler_params=pltpu.CompilerParams(
            # NOTE: B*n_q should be >= #TensorCores (v7x has 2) for balance;
            # both leading axes are parallel so megacore can shard either.
            dimension_semantics=("parallel", "parallel", "arbitrary"),
            vmem_limit_bytes=_maybe_vmem_limit(est2)),
        cost_estimate=cost2,
    )(x, q, k, v, wo3, ln1_w, ln1_b)

    # ------------------------------------------------------------------
    # Kernel 3: FFN (streamed W1/W2 over d_ff chunks) + residual + LN2.
    # ------------------------------------------------------------------
    a1_2d = a1.reshape(rows, D)
    est3 = (2 * (tr * D * 4) + 2 * (D * tf * cdb) + 2 * (tf * D * cdb)
            + 2 * (tr * D * 4) + tr * D * 4 + 4 * D * 4)
    cost3 = pl.CostEstimate(
        flops=int(4 * rows * D * d_ff), transcendentals=0,
        bytes_accessed=int(2 * rows * D * 4 + n_r * 2 * D * d_ff * cdb))
    out2d = pl.pallas_call(
        functools.partial(_ffn_ln2_kernel, eps=eps, compute_dtype=cd),
        out_shape=jax.ShapeDtypeStruct((rows, D), x.dtype),
        grid_spec=pltpu.PrefetchScalarGridSpec(
            num_scalar_prefetch=0,
            grid=(n_r, n_f),
            in_specs=[
                pl.BlockSpec((tr, D), lambda r, f: (r, 0)),     # a1 (const in f)
                pl.BlockSpec((D, tf), lambda r, f: (0, f)),     # W1 chunk
                pl.BlockSpec((tf, D), lambda r, f: (f, 0)),     # W2 chunk
                pl.BlockSpec((1, D), lambda r, f: (0, 0)),
                pl.BlockSpec((1, D), lambda r, f: (0, 0)),
            ],
            out_specs=pl.BlockSpec((tr, D), lambda r, f: (r, 0)),
            scratch_shapes=[pltpu.VMEM((tr, D), jnp.float32)],
        ),
        compiler_params=pltpu.CompilerParams(
            dimension_semantics=("parallel", "arbitrary"),
            vmem_limit_bytes=_maybe_vmem_limit(est3)),
        cost_estimate=cost3,
    )(a1_2d, w1, w2, ln2_w, ln2_b)

    return out2d.reshape(B, S, D)


# ---------------------------------------------------------------------------
# Pure-JAX reference mirroring the PyTorch forward (eval mode)
# ---------------------------------------------------------------------------

def decoder_block_reference(x, params, *, heads, eps=1e-5):
    B, S, D = x.shape
    d_key = D // heads
    q = x @ params["wq"]
    k = x @ params["wk"]
    v = x @ params["wv"]
    outs = []
    for h in range(heads):
        sl = slice(h * d_key, (h + 1) * d_key)
        s = jnp.einsum("bsd,btd->bst", q[..., sl], k[..., sl]) / jnp.sqrt(d_key)
        p = jax.nn.softmax(s, axis=-1)
        outs.append(jnp.einsum("bst,btd->bsd", p, v[..., sl]))
    attn = jnp.concatenate(outs, axis=-1) @ params["wo"]

    def ln(t, w, b):
        mu = jnp.mean(t, axis=-1, keepdims=True)
        var = jnp.mean((t - mu) ** 2, axis=-1, keepdims=True)
        return (t - mu) / jnp.sqrt(var + eps) * w + b

    a1 = ln(x + attn, params["ln1_w"], params["ln1_b"])
    h1 = jnp.maximum(a1 @ params["w1"], 0.0)
    a2 = ln(a1 + h1 @ params["w2"], params["ln2_w"], params["ln2_b"])
    return a2


if __name__ == "__main__":
    B, S, D, HEADS = 2, 8, 32, 4
    D_FF = 4 * D

    key = jax.random.PRNGKey(0)
    ks = jax.random.split(key, 11)
    scale = 0.1
    params = {
        "wq": scale * jax.random.normal(ks[0], (D, D), jnp.float32),
        "wk": scale * jax.random.normal(ks[1], (D, D), jnp.float32),
        "wv": scale * jax.random.normal(ks[2], (D, D), jnp.float32),
        "wo": scale * jax.random.normal(ks[3], (D, D), jnp.float32),
        "ln1_w": 1.0 + scale * jax.random.normal(ks[4], (1, D), jnp.float32),
        "ln1_b": scale * jax.random.normal(ks[5], (1, D), jnp.float32),
        "w1": scale * jax.random.normal(ks[6], (D, D_FF), jnp.float32),
        "w2": scale * jax.random.normal(ks[7], (D_FF, D), jnp.float32),
        "ln2_w": 1.0 + scale * jax.random.normal(ks[8], (1, D), jnp.float32),
        "ln2_b": scale * jax.random.normal(ks[9], (1, D), jnp.float32),
    }
    x = jax.random.normal(ks[10], (B, S, D), jnp.float32)

    ref = decoder_block_reference(x, params, heads=HEADS)

    # 1) f32 MXU operands: tight check against the exact reference.
    out_f32 = jax.block_until_ready(
        decoder_block(x, params, heads=HEADS, compute_dtype=jnp.float32))
    assert out_f32.shape == (B, S, D)
    assert jnp.allclose(out_f32, ref, atol=1e-2, rtol=1e-2), \
        "f32 kernel mismatch vs JAX reference"

    # 2) bf16 MXU operands (production config): compare against a reference
    #    that uses the same bf16-quantized weights, with a looser tolerance.
    qparams = dict(params)
    for name in ("wq", "wk", "wv", "wo", "w1", "w2"):
        qparams[name] = params[name].astype(jnp.bfloat16).astype(jnp.float32)
    ref_bf16 = decoder_block_reference(x, qparams, heads=HEADS)
    out_bf16 = jax.block_until_ready(
        decoder_block(x, params, heads=HEADS, compute_dtype=jnp.bfloat16))
    assert jnp.allclose(out_bf16, ref_bf16, atol=5e-2, rtol=5e-2), \
        "bf16 kernel mismatch vs bf16-weight JAX reference"

    print("KERNEL_OK")
</pallas_src>

<mosaic_0001>
module attributes {stable_mosaic.version = 11 : i64} {
  func.func @_qkv_proj_kernel(%arg0: i32, %arg1: memref<16x32xf32, #tpu.memory_space<vmem>>, %arg2: memref<32x96xf32, #tpu.memory_space<vmem>>, %arg3: memref<16x96xf32, #tpu.memory_space<vmem>>) attributes {dimension_semantics = [#tpu.dimension_semantics<parallel>], iteration_bounds = array<i64: 1>, scalar_prefetch = 0 : i64, scratch_operands = 0 : i64, tpu.core_type = #tpu.core_type<tc>, window_params = [{transform_indices = @transform_0, window_bounds = array<i64: 16, 32>}, {pipeline_mode = #tpu.pipeline_mode<synchronous>, transform_indices = @transform_1, window_bounds = array<i64: 32, 96>}, {transform_indices = @transform_2, window_bounds = array<i64: 16, 96>}]} {
    %c0 = arith.constant 0 : index
    %c0_0 = arith.constant 0 : index
    %0 = vector.load %arg1[%c0, %c0_0] : memref<16x32xf32, #tpu.memory_space<vmem>>, vector<16x32xf32>
    %c0_1 = arith.constant 0 : index
    %c0_2 = arith.constant 0 : index
    %1 = vector.load %arg2[%c0_1, %c0_2] : memref<32x96xf32, #tpu.memory_space<vmem>>, vector<32x96xf32>
    %cst = arith.constant dense<0.000000e+00> : vector<16x96xf32>
    %2 = tpu.matmul %0, %1, %cst {dimension_numbers = #tpu.dot_dimension_numbers<[1], [0], [0], [1], [0, 0, 1, 1], [], []>} : vector<16x32xf32>, vector<32x96xf32>, vector<16x96xf32> -> vector<16x96xf32>
    %c0_3 = arith.constant 0 : index
    %c0_4 = arith.constant 0 : index
    %3 = vector.load %arg3[%c0_3, %c0_4] : memref<16x96xf32, #tpu.memory_space<vmem>>, vector<16x96xf32>
    tpu.vector_store %arg3[%c0_3, %c0_4], %2 {strides = array<i32>} : memref<16x96xf32, #tpu.memory_space<vmem>>, vector<16x96xf32>,
    return
  }
  func.func @transform_0(%arg0: i32) -> (i32, i32) {
    %c0_i32 = arith.constant 0 : i32
    %c0_i32_0 = arith.constant 0 : i32
    return %arg0, %c0_i32 : i32, i32
  }
  func.func @transform_1(%arg0: i32) -> (i32, i32) {
    %c0_i32 = arith.constant 0 : i32
    %c0_i32_0 = arith.constant 0 : i32
    %c0_i32_1 = arith.constant 0 : i32
    return %c0_i32, %c0_i32_0 : i32, i32
  }
  func.func @transform_2(%arg0: i32) -> (i32, i32) {
    %c0_i32 = arith.constant 0 : i32
    %c0_i32_0 = arith.constant 0 : i32
    return %arg0, %c0_i32 : i32, i32
  }
}

</mosaic_0001>

<llo_original>
// kernel: tpu_custom_call.1
$region0: #{tpu_custom_call.1}
  #allocation0 [shape = 'u32[]', space=smem, size = 0x4, offset = 0x4, fixed_abs, tag = 'smem constant byte address 0x4 - core index']
  #allocation1 [shape = 'u32[72,128]{1,0:T(1,128)}', space=vmem, size = 0x9000, scoped, tag = 'internal scratch']
  %s0 = inlined_call_operand.hbm [shape: f32[16,32], index: 0, kind: input, shape index: {}]
  %s1 = inlined_call_operand.hbm [shape: f32[32,96], index: 1, kind: input, shape index: {}]
  %s2 = inlined_call_operand.hbm [shape: f32[16,96], index: 2, kind: output, shape index: {}]
  %s3 = sld [smem:[#allocation0]]
  $region26: #{tpu_custom_call.1} parent=0
    _
  %s5 = ssub.s32 1, %s3
  %s6 = scalar_select 0, %s5, %s3
  $region1: #{tpu_custom_call.1} parent=0
    #allocation2 [shape = 'u8[8192]{0}', space=vmem, size = 0x2000, scoped, tag = 'input window, operand 0, single buffered']
    #allocation3 [shape = 's32[1]{0}', space=sflag, size = 0x4, scoped, tag = 'scoped memory for tpu_custom_call.1']
    #allocation4 [shape = 's32[1]{0}', space=sflag, size = 0x4, scoped, tag = 'scoped memory for tpu_custom_call.1']
    #allocation5 [shape = 'u8[16384]{0}', space=vmem, size = 0x4000, scoped, tag = 'input window, operand 1, single buffered']
    #allocation6 [shape = 's32[1]{0}', space=sflag, size = 0x4, scoped, tag = 'scoped memory for tpu_custom_call.1']
    #allocation7 [shape = 'u8[8192]{0}', space=vmem, size = 0x2000, scoped, tag = 'output window, operand 0, single buffered']
    %7 = vsyncpa [#allocation3], 0
    %8 = vsyncpa [#allocation6], 0
    %9 = vsyncpa [#allocation4], 0
    // Predicated region
    $region2: #{tpu_custom_call.1} parent=1 // pred_check
      _
    $region3: #{tpu_custom_call.1} parent=1 // pred_check_branch
      %11 = sbr.rel (0) target = $region5
    $region4: #{tpu_custom_call.1} parent=1 // pred_region
      %13 = vsyncadd [#allocation3], 0
      %s14 = sshll.u32 %s0, 4
      %s15 = int_to_ptr.hbm [resolvable:$true] %s14
      %s16 = sshll.u32 [#allocation2], 4
      %s17 = int_to_ptr.vmem [resolvable:$true] %s16
      %22 = dma.hbm_to_vmem [thread:$0]  %s15, 256, %s17, [#allocation3], 128, 128, 8
    $region5: #{tpu_custom_call.1} parent=1 // pred_fallthru
      _
    // Predicated region
    $region6: #{tpu_custom_call.1} parent=1 // pred_check
      _
    $region7: #{tpu_custom_call.1} parent=1 // pred_check_branch
      %24 = sbr.rel (0) target = $region9
    $region8: #{tpu_custom_call.1} parent=1 // pred_region
      %26 = vsyncadd [#allocation6], 0
      %s27 = sshll.u32 %s1, 4
      %s28 = int_to_ptr.hbm [resolvable:$true] %s27
      %s29 = sshll.u32 [#allocation5], 4
      %s30 = int_to_ptr.vmem [resolvable:$true] %s29
      %35 = dma.hbm_to_vmem [thread:$0]  %s28, 512, %s30, [#allocation6], 128, 128, 8
    $region9: #{tpu_custom_call.1} parent=1 // pred_fallthru
      _
    // Predicated region
    $region10: #{tpu_custom_call.1} parent=1 // pred_check
      _
    $region11: #{tpu_custom_call.1} parent=1 // pred_check_branch
      %37 = sbr.rel (0) target = $region13
    $region12: #{tpu_custom_call.1} parent=1 // pred_region
      %39 = dma.done [#allocation3], 256
    $region13: #{tpu_custom_call.1} parent=1 // pred_fallthru
      _
    // Predicated region
    $region14: #{tpu_custom_call.1} parent=1 // pred_check
      _
    $region15: #{tpu_custom_call.1} parent=1 // pred_check_branch
      %41 = sbr.rel (0) target = $region17
    $region16: #{tpu_custom_call.1} parent=1 // pred_region
      %43 = dma.done [#allocation6], 512
    $region17: #{tpu_custom_call.1} parent=1 // pred_fallthru
      _
    %v44 = vld [vmem:[#allocation2] sm:$0xff]
    %v45 = vld [vmem:[#allocation2 + $0x8] sm:$0xff]
    %v46 = vld [vmem:[#allocation5] sm:$0xff]
    %v47 = vld [vmem:[#allocation5 + $0x8] sm:$0xff]
    %v48 = vld [vmem:[#allocation5 + $0x10] sm:$0xff]
    %v49 = vld [vmem:[#allocation5 + $0x18] sm:$0xff]
    %vm50 = vcmask 261120
    %v52 = vsel %vm50, %v44, 0
    %v55 = vsel %vm50, %v45, 0
    %57 = vmatpush.msra.mxu0 0.0
    %58 = vmatpush.msra.mxu0 0.0
    %59 = vmatpush.msra.mxu0 0.0
    %60 = vmatpush.msra.mxu0 0.0
    %61 = vmatpush.msra.mxu0 0.0
    %62 = vmatpush.msra.mxu0 0.0
    %63 = vmatpush.msra.mxu0 0.0
    %64 = vmatpush.msra.mxu0 0.0
    %65 = vmatpush.msra.mxu0 0.0
    %66 = vmatpush.msra.mxu0 0.0
    %67 = vmatpush.msra.mxu0 0.0
    %68 = vmatpush.msra.mxu0 0.0
    %69 = vmatpush.msra.mxu0 %v49
    %70 = vmatpush.msra.mxu0 %v48
    %71 = vmatpush.msra.mxu0 %v47
    %72 = vmatpush.msra.mxu0 %v46
    %73 = vmatmul.f32.gmra.mxu0 %v52
    %v74 = vpop.f32.mrf.mxu0
    %v75 = vadd.f32 0.0, %v74
    %76 = vmatmul.f32.gmra.mxu0 %v55
    %v77 = vpop.f32.mrf.mxu0
    %v78 = vadd.f32 0.0, %v77
    %79 = vdwg.mxu0
    %vm80 = vcmask 785408
    %81 = vst.msk [vmem:[#allocation7] sm:$0xff] %vm80, %v75
    %82 = vst.msk [vmem:[#allocation7 + $0x8] sm:$0xff] %vm80, %v78
    // Predicated region
    $region18: #{tpu_custom_call.1} parent=1 // pred_check
      _
    $region19: #{tpu_custom_call.1} parent=1 // pred_check_branch
      %84 = sbr.rel (0) target = $region21
    $region20: #{tpu_custom_call.1} parent=1 // pred_region
      %86 = vsyncadd [#allocation4], 0
      %s87 = sshll.u32 [#allocation7], 4
      %s88 = int_to_ptr.vmem [resolvable:$true] %s87
      %s89 = sshll.u32 %s2, 4
      %s90 = int_to_ptr.hbm [resolvable:$true] %s89
      %95 = dma.vmem_to_hbm [thread:$0]  %s88, 256, %s90, [#allocation4], 128, 128, 8
    $region21: #{tpu_custom_call.1} parent=1 // pred_fallthru
      _
    // Predicated region
    $region22: #{tpu_custom_call.1} parent=1 // pred_check
      _
    $region23: #{tpu_custom_call.1} parent=1 // pred_check_branch
      %97 = sbr.rel (0) target = $region25
    $region24: #{tpu_custom_call.1} parent=1 // pred_region
      %99 = dma.done [#allocation4], 256
    $region25: #{tpu_custom_call.1} parent=1 // pred_fallthru
      _
    %100 = vsyncpa [#allocation3], 1
    %101 = vsyncpa [#allocation6], 1
    %102 = vsyncpa [#allocation4], 1

</llo_original>
